<compile_context>
chip_gen: v5e
topology: v5e:2x2
jax: 0.10.0
libtpu: 0.0.40
codegen_flags: <defaults>
</compile_context>

<pallas_src>
import math

import numpy as np
import jax
import jax.numpy as jnp
from jax.experimental import pallas as pl
from jax.experimental.pallas import tpu as pltpu


def _round_up(n, m):
    return ((n + m - 1) // m) * m


def _fcnet_kernel(x_ref, w1_ref, b1_ref, w2_ref, b2_ref, w3_ref, b3_ref, o_ref):
    # Normalization is already folded into w1/b1; kernel is 3x (matmul+bias[+relu]).
    # Cast the f32 input tile to the MXU compute dtype here (no wrapper-side
    # cast pass over the largest tensor).
    x = x_ref[...].astype(w1_ref.dtype)

    # Layer 1: Linear + ReLU (MXU in compute dtype, f32 accumulation)
    h1 = jnp.dot(x, w1_ref[...], preferred_element_type=jnp.float32) + b1_ref[...]
    h1 = jnp.maximum(h1, 0.0)

    # Layer 2: Linear + ReLU
    h2 = (
        jnp.dot(h1.astype(w2_ref.dtype), w2_ref[...], preferred_element_type=jnp.float32)
        + b2_ref[...]
    )
    h2 = jnp.maximum(h2, 0.0)

    # Layer 3: Linear (logits), stored lane-dense (128 wide) in o_ref.dtype
    o_ref[...] = (
        jnp.dot(h2.astype(w3_ref.dtype), w3_ref[...], preferred_element_type=jnp.float32)
        + b3_ref[...]
    ).astype(o_ref.dtype)


def prepare_fcnet_params(params, compute_dtype=jnp.bfloat16):
    """One-time parameter prep: fold normalization into layer 1, transpose
    weights to (in, out), zero-pad hidden/output dims to multiples of 128
    (input feature dim is left unpadded), cast weights to the MXU compute
    dtype (biases stay f32)."""
    scale = 1.0 / 0.3081
    shift = 0.1307

    w1 = params["w1"].astype(jnp.float32)  # (hidden, in)
    b1 = params["b1"].astype(jnp.float32)
    w2 = params["w2"].astype(jnp.float32)  # (hidden, hidden)
    b2 = params["b2"].astype(jnp.float32)
    w3 = params["w3"].astype(jnp.float32)  # (out, hidden)
    b3 = params["b3"].astype(jnp.float32)

    hidden, d_in = w1.shape
    out_dim = w3.shape[0]

    # Fold (x - shift) * scale into layer 1:
    #   x @ (W1^T * scale) + (b1 - shift*scale*sum_in W1)
    w1f = w1 * scale
    b1f = b1 - shift * scale * jnp.sum(w1, axis=1)

    h_p = _round_up(hidden, 128)
    o_p = _round_up(out_dim, 128)

    def pad2(a, rows, cols):
        return jnp.pad(a, ((0, rows - a.shape[0]), (0, cols - a.shape[1])))

    return {
        "w1": pad2(w1f.T, d_in, h_p).astype(compute_dtype),  # (d_in, h_p)
        "b1": jnp.pad(b1f, (0, h_p - hidden)).reshape(1, h_p),
        "w2": pad2(w2.T, h_p, h_p).astype(compute_dtype),    # (h_p, h_p)
        "b2": jnp.pad(b2, (0, h_p - hidden)).reshape(1, h_p),
        "w3": pad2(w3.T, h_p, o_p).astype(compute_dtype),    # (h_p, o_p)
        "b3": jnp.pad(b3, (0, o_p - out_dim)).reshape(1, o_p),
        "input_dim": d_in,
        "out_dim": out_dim,
    }


def fcnet_forward(x_nchw, prep, *, block_m=1024, out_dtype=None):
    """fcNet forward. x_nchw: (B, C, H, W) float32; prep: prepare_fcnet_params output."""
    b = x_nchw.shape[0]
    x2d = x_nchw.reshape(b, -1)  # nn.Flatten() (layout-only, no HBM pass)
    d_in = x2d.shape[1]
    assert d_in == prep["input_dim"]

    d_in_w, h_p = prep["w1"].shape
    assert d_in_w == d_in
    o_p = prep["w3"].shape[1]
    out_dim = prep["out_dim"]
    if out_dtype is None:
        # bf16 logits in production (halves output HBM writes); f32 for the
        # f32 verification path.
        out_dtype = prep["w1"].dtype

    # Batch tile: multiple of 8 (f32 sublane), capped at block_m, and capped at
    # ~ceil(b/2) so the 1-D "parallel" grid has >=2 steps whenever the batch
    # allows it (both v7x TensorCores get a share; harmless on v5e/v6e).
    tm = min(block_m, _round_up(max((b + 1) // 2, 1), 8))
    grid_m = pl.cdiv(b, tm)  # ragged last block handled by Pallas edge masking

    # Advisory cost estimate so XLA can schedule surrounding ops.
    flops = 2 * b * (d_in * h_p + h_p * h_p + h_p * o_p)
    weight_bytes = sum(
        int(prep[k].size) * prep[k].dtype.itemsize
        for k in ("w1", "b1", "w2", "b2", "w3", "b3")
    )
    bytes_accessed = (
        int(x2d.size) * x2d.dtype.itemsize
        + weight_bytes
        + b * o_p * np.dtype(out_dtype).itemsize
    )

    out = pl.pallas_call(
        _fcnet_kernel,
        out_shape=jax.ShapeDtypeStruct((b, o_p), out_dtype),
        grid_spec=pltpu.PrefetchScalarGridSpec(
            num_scalar_prefetch=0,
            grid=(grid_m,),
            in_specs=[
                pl.BlockSpec((tm, d_in), lambda i: (i, 0)),   # x: tiled over batch (f32)
                pl.BlockSpec((d_in, h_p), lambda i: (0, 0)),  # w1: VMEM-resident
                pl.BlockSpec((1, h_p), lambda i: (0, 0)),     # b1
                pl.BlockSpec((h_p, h_p), lambda i: (0, 0)),   # w2
                pl.BlockSpec((1, h_p), lambda i: (0, 0)),     # b2
                pl.BlockSpec((h_p, o_p), lambda i: (0, 0)),   # w3
                pl.BlockSpec((1, o_p), lambda i: (0, 0)),     # b3
            ],
            out_specs=pl.BlockSpec((tm, o_p), lambda i: (i, 0)),
        ),
        compiler_params=pltpu.CompilerParams(
            dimension_semantics=("parallel",),
            # Headroom for large tiles on v5e's 16 MiB default scoped VMEM;
            # matches the default on v6e/v7x.
            vmem_limit_bytes=32 * 1024 * 1024,
        ),
        cost_estimate=pl.CostEstimate(
            flops=flops, transcendentals=0, bytes_accessed=bytes_accessed
        ),
    )(x2d, prep["w1"], prep["b1"], prep["w2"], prep["b2"], prep["w3"], prep["b3"])

    # Consumers that accept 128-wide padded logits (e.g. fused argmax) can skip
    # this slice; padded columns hold exactly 0.
    return out[:, :out_dim]


def _xavier_uniform(key, out_features, in_features):
    # Matches torch.nn.init.xavier_uniform_ for a (out, in) weight matrix.
    bound = math.sqrt(6.0 / (in_features + out_features))
    return jax.random.uniform(
        key, (out_features, in_features), jnp.float32, minval=-bound, maxval=bound
    )


def init_fcnet_params(key, input_dim, hidden_dim, output_dim):
    k1, k2, k3 = jax.random.split(key, 3)
    return {
        "w1": _xavier_uniform(k1, hidden_dim, input_dim),
        "b1": jnp.zeros((hidden_dim,), jnp.float32),
        "w2": _xavier_uniform(k2, hidden_dim, hidden_dim),
        "b2": jnp.zeros((hidden_dim,), jnp.float32),
        "w3": _xavier_uniform(k3, output_dim, hidden_dim),
        "b3": jnp.zeros((output_dim,), jnp.float32),
    }


if __name__ == "__main__":
    key = jax.random.PRNGKey(0)
    k_x, k_p, k_x2 = jax.random.split(key, 3)

    # Small MNIST-like input: batch=2, channels=1, spatial=16x16 -> input_dim=256
    B, C, H, W = 2, 1, 16, 16
    input_dim = C * H * W
    hidden_dim = 32
    output_dim = 10

    x = jax.random.normal(k_x, (B, C, H, W), jnp.float32)
    params = init_fcnet_params(k_p, input_dim, hidden_dim, output_dim)

    # Pure-JAX f32 reference of the original (un-folded) forward.
    def ref_forward(xin):
        xn = (xin.reshape(xin.shape[0], -1) - 0.1307) / 0.3081
        h1 = jnp.maximum(xn @ params["w1"].T + params["b1"], 0.0)
        h2 = jnp.maximum(h1 @ params["w2"].T + params["b2"], 0.0)
        return h2 @ params["w3"].T + params["b3"]

    ref = ref_forward(x)

    # f32 compute path: tight check of kernel logic + normalization fold + padding.
    prep_f32 = prepare_fcnet_params(params, compute_dtype=jnp.float32)
    out_f32 = fcnet_forward(x, prep_f32)
    jax.block_until_ready(out_f32)
    assert out_f32.shape == (B, output_dim)
    assert jnp.allclose(out_f32, ref, atol=1e-3, rtol=1e-3)

    # bf16 production path (bf16 MXU inputs + bf16 logits, f32 accumulation).
    prep_bf16 = prepare_fcnet_params(params, compute_dtype=jnp.bfloat16)
    out_bf16 = fcnet_forward(x, prep_bf16)
    jax.block_until_ready(out_bf16)
    assert out_bf16.shape == (B, output_dim)
    err = jnp.max(jnp.abs(out_bf16.astype(jnp.float32) - ref))
    tol = 5e-2 * jnp.maximum(1.0, jnp.max(jnp.abs(ref)))
    assert err <= tol, (err, tol)

    # Multi-step ragged grid path: b=20, block_m=16 -> tm=16, grid=2 with a
    # 4-row edge block (exercises edge masking and the >=2-step v7x sharding).
    B2 = 20
    x2 = jax.random.normal(k_x2, (B2, C, H, W), jnp.float32)
    ref2 = ref_forward(x2)
    out2 = fcnet_forward(x2, prep_f32, block_m=16)
    jax.block_until_ready(out2)
    assert out2.shape == (B2, output_dim)
    assert jnp.allclose(out2, ref2, atol=1e-3, rtol=1e-3)

    print("KERNEL_OK")
</pallas_src>

<mosaic_0001>
module attributes {stable_mosaic.version = 11 : i64} {
  func.func @_fcnet_kernel(%arg0: i32, %arg1: memref<8x256xf32, #tpu.memory_space<vmem>>, %arg2: memref<256x128xf32, #tpu.memory_space<vmem>>, %arg3: memref<1x128xf32, #tpu.memory_space<vmem>>, %arg4: memref<128x128xf32, #tpu.memory_space<vmem>>, %arg5: memref<1x128xf32, #tpu.memory_space<vmem>>, %arg6: memref<128x128xf32, #tpu.memory_space<vmem>>, %arg7: memref<1x128xf32, #tpu.memory_space<vmem>>, %arg8: memref<8x128xf32, #tpu.memory_space<vmem>>) attributes {dimension_semantics = [#tpu.dimension_semantics<parallel>], iteration_bounds = array<i64: 1>, scalar_prefetch = 0 : i64, scratch_operands = 0 : i64, tpu.core_type = #tpu.core_type<tc>, window_params = [{transform_indices = @transform_0, window_bounds = array<i64: 8, 256>}, {pipeline_mode = #tpu.pipeline_mode<synchronous>, transform_indices = @transform_1, window_bounds = array<i64: 256, 128>}, {pipeline_mode = #tpu.pipeline_mode<synchronous>, transform_indices = @transform_2, window_bounds = array<i64: 1, 128>}, {pipeline_mode = #tpu.pipeline_mode<synchronous>, transform_indices = @transform_3, window_bounds = array<i64: 128, 128>}, {pipeline_mode = #tpu.pipeline_mode<synchronous>, transform_indices = @transform_4, window_bounds = array<i64: 1, 128>}, {pipeline_mode = #tpu.pipeline_mode<synchronous>, transform_indices = @transform_5, window_bounds = array<i64: 128, 128>}, {pipeline_mode = #tpu.pipeline_mode<synchronous>, transform_indices = @transform_6, window_bounds = array<i64: 1, 128>}, {transform_indices = @transform_7, window_bounds = array<i64: 8, 128>}]} {
    %c0 = arith.constant 0 : index
    %c0_0 = arith.constant 0 : index
    %0 = vector.load %arg1[%c0, %c0_0] : memref<8x256xf32, #tpu.memory_space<vmem>>, vector<8x256xf32>
    %c0_1 = arith.constant 0 : index
    %c0_2 = arith.constant 0 : index
    %1 = vector.load %arg2[%c0_1, %c0_2] : memref<256x128xf32, #tpu.memory_space<vmem>>, vector<256x128xf32>
    %cst = arith.constant dense<0.000000e+00> : vector<8x128xf32>
    %2 = tpu.matmul %0, %1, %cst {dimension_numbers = #tpu.dot_dimension_numbers<[1], [0], [0], [1], [0, 0, 1, 1], [], []>} : vector<8x256xf32>, vector<256x128xf32>, vector<8x128xf32> -> vector<8x128xf32>
    %c0_3 = arith.constant 0 : index
    %c0_4 = arith.constant 0 : index
    %3 = vector.load %arg3[%c0_3, %c0_4] : memref<1x128xf32, #tpu.memory_space<vmem>>, vector<1x128xf32>
    %4 = vector.broadcast %3 : vector<1x128xf32> to vector<8x128xf32>
    %5 = arith.addf %2, %4 : vector<8x128xf32>
    %cst_5 = arith.constant 0.000000e+00 : f32
    %6 = vector.broadcast %cst_5 : f32 to vector<8x128xf32>
    %7 = arith.maximumf %5, %6 : vector<8x128xf32>
    %c0_6 = arith.constant 0 : index
    %c0_7 = arith.constant 0 : index
    %8 = vector.load %arg4[%c0_6, %c0_7] : memref<128x128xf32, #tpu.memory_space<vmem>>, vector<128x128xf32>
    %cst_8 = arith.constant dense<0.000000e+00> : vector<8x128xf32>
    %9 = tpu.matmul %7, %8, %cst_8 {dimension_numbers = #tpu.dot_dimension_numbers<[1], [0], [0], [1], [0, 0, 1, 1], [], []>} : vector<8x128xf32>, vector<128x128xf32>, vector<8x128xf32> -> vector<8x128xf32>
    %c0_9 = arith.constant 0 : index
    %c0_10 = arith.constant 0 : index
    %10 = vector.load %arg5[%c0_9, %c0_10] : memref<1x128xf32, #tpu.memory_space<vmem>>, vector<1x128xf32>
    %11 = vector.broadcast %10 : vector<1x128xf32> to vector<8x128xf32>
    %12 = arith.addf %9, %11 : vector<8x128xf32>
    %cst_11 = arith.constant 0.000000e+00 : f32
    %13 = vector.broadcast %cst_11 : f32 to vector<8x128xf32>
    %14 = arith.maximumf %12, %13 : vector<8x128xf32>
    %c0_12 = arith.constant 0 : index
    %c0_13 = arith.constant 0 : index
    %15 = vector.load %arg6[%c0_12, %c0_13] : memref<128x128xf32, #tpu.memory_space<vmem>>, vector<128x128xf32>
    %cst_14 = arith.constant dense<0.000000e+00> : vector<8x128xf32>
    %16 = tpu.matmul %14, %15, %cst_14 {dimension_numbers = #tpu.dot_dimension_numbers<[1], [0], [0], [1], [0, 0, 1, 1], [], []>} : vector<8x128xf32>, vector<128x128xf32>, vector<8x128xf32> -> vector<8x128xf32>
    %c0_15 = arith.constant 0 : index
    %c0_16 = arith.constant 0 : index
    %17 = vector.load %arg7[%c0_15, %c0_16] : memref<1x128xf32, #tpu.memory_space<vmem>>, vector<1x128xf32>
    %18 = vector.broadcast %17 : vector<1x128xf32> to vector<8x128xf32>
    %19 = arith.addf %16, %18 : vector<8x128xf32>
    %c0_17 = arith.constant 0 : index
    %c0_18 = arith.constant 0 : index
    %20 = vector.load %arg8[%c0_17, %c0_18] : memref<8x128xf32, #tpu.memory_space<vmem>>, vector<8x128xf32>
    tpu.vector_store %arg8[%c0_17, %c0_18], %19 {strides = array<i32>} : memref<8x128xf32, #tpu.memory_space<vmem>>, vector<8x128xf32>,
    return
  }
  func.func @transform_0(%arg0: i32) -> (i32, i32) {
    %c0_i32 = arith.constant 0 : i32
    %c0_i32_0 = arith.constant 0 : i32
    return %arg0, %c0_i32 : i32, i32
  }
  func.func @transform_1(%arg0: i32) -> (i32, i32) {
    %c0_i32 = arith.constant 0 : i32
    %c0_i32_0 = arith.constant 0 : i32
    %c0_i32_1 = arith.constant 0 : i32
    return %c0_i32, %c0_i32_0 : i32, i32
  }
  func.func @transform_2(%arg0: i32) -> (i32, i32) {
    %c0_i32 = arith.constant 0 : i32
    %c0_i32_0 = arith.constant 0 : i32
    %c0_i32_1 = arith.constant 0 : i32
    return %c0_i32, %c0_i32_0 : i32, i32
  }
  func.func @transform_3(%arg0: i32) -> (i32, i32) {
    %c0_i32 = arith.constant 0 : i32
    %c0_i32_0 = arith.constant 0 : i32
    %c0_i32_1 = arith.constant 0 : i32
    return %c0_i32, %c0_i32_0 : i32, i32
  }
  func.func @transform_4(%arg0: i32) -> (i32, i32) {
    %c0_i32 = arith.constant 0 : i32
    %c0_i32_0 = arith.constant 0 : i32
    %c0_i32_1 = arith.constant 0 : i32
    return %c0_i32, %c0_i32_0 : i32, i32
  }
  func.func @transform_5(%arg0: i32) -> (i32, i32) {
    %c0_i32 = arith.constant 0 : i32
    %c0_i32_0 = arith.constant 0 : i32
    %c0_i32_1 = arith.constant 0 : i32
    return %c0_i32, %c0_i32_0 : i32, i32
  }
  func.func @transform_6(%arg0: i32) -> (i32, i32) {
    %c0_i32 = arith.constant 0 : i32
    %c0_i32_0 = arith.constant 0 : i32
    %c0_i32_1 = arith.constant 0 : i32
    return %c0_i32, %c0_i32_0 : i32, i32
  }
  func.func @transform_7(%arg0: i32) -> (i32, i32) {
    %c0_i32 = arith.constant 0 : i32
    %c0_i32_0 = arith.constant 0 : i32
    return %arg0, %c0_i32 : i32, i32
  }
}

</mosaic_0001>

<llo_original>
// kernel: tpu_custom_call.1
$region0: #{tpu_custom_call.1}
  #allocation0 [shape = 'u32[]', space=smem, size = 0x4, offset = 0x4, fixed_abs, tag = 'smem constant byte address 0x4 - core index']
  #allocation1 [shape = 'u32[72,128]{1,0:T(1,128)}', space=vmem, size = 0x9000, scoped, tag = 'internal scratch']
  %s0 = inlined_call_operand.hbm [shape: f32[2,256], index: 0, kind: input, shape index: {}]
  %s1 = inlined_call_operand.hbm [shape: f32[256,128], index: 1, kind: input, shape index: {}]
  %s2 = inlined_call_operand.vmem [shape: f32[1,128], index: 2, kind: input, shape index: {}]
  %s3 = inlined_call_operand.hbm [shape: f32[128,128], index: 3, kind: input, shape index: {}]
  %s4 = inlined_call_operand.vmem [shape: f32[1,128], index: 4, kind: input, shape index: {}]
  %s5 = inlined_call_operand.hbm [shape: f32[128,128], index: 5, kind: input, shape index: {}]
  %s6 = inlined_call_operand.vmem [shape: f32[1,128], index: 6, kind: input, shape index: {}]
  %s7 = inlined_call_operand.hbm [shape: f32[2,128], index: 7, kind: output, shape index: {}]
  %s8 = sld [smem:[#allocation0]]
  $region54: #{tpu_custom_call.1} parent=0
    _
  %s10 = ssub.s32 1, %s8
  %s11 = scalar_select 0, %s10, %s8
  $region1: #{tpu_custom_call.1} parent=0
    #allocation2 [shape = 'u8[8192]{0}', space=vmem, size = 0x2000, scoped, tag = 'input window, operand 0, single buffered']
    #allocation3 [shape = 's32[1]{0}', space=sflag, size = 0x4, scoped, tag = 'scoped memory for tpu_custom_call.1']
    #allocation4 [shape = 's32[1]{0}', space=sflag, size = 0x4, scoped, tag = 'scoped memory for tpu_custom_call.1']
    #allocation5 [shape = 'u8[131072]{0}', space=vmem, size = 0x20000, scoped, tag = 'input window, operand 1, single buffered']
    #allocation6 [shape = 's32[1]{0}', space=sflag, size = 0x4, scoped, tag = 'scoped memory for tpu_custom_call.1']
    #allocation7 [shape = 'u8[65536]{0}', space=vmem, size = 0x10000, scoped, tag = 'input window, operand 3, single buffered']
    #allocation8 [shape = 'u8[65536]{0}', space=vmem, size = 0x10000, scoped, tag = 'input window, operand 5, single buffered']
    #allocation9 [shape = 's32[1]{0}', space=sflag, size = 0x4, scoped, tag = 'scoped memory for tpu_custom_call.1']
    #allocation10 [shape = 'u8[4096]{0}', space=vmem, size = 0x1000, scoped, tag = 'output window, operand 0, single buffered']
    %12 = vsyncpa [#allocation3], 0
    %13 = vsyncpa [#allocation6], 0
    %14 = vsyncpa [#allocation9], 0
    %15 = vsyncpa [#allocation4], 0
    // Predicated region
    $region2: #{tpu_custom_call.1} parent=1 // pred_check
      _
    $region3: #{tpu_custom_call.1} parent=1 // pred_check_branch
      %17 = sbr.rel (0) target = $region5
    $region4: #{tpu_custom_call.1} parent=1 // pred_region
      %19 = vsyncadd [#allocation3], 192
      %s20 = sshll.u32 %s0, 4
      %s21 = int_to_ptr.hbm [resolvable:$true] %s20
      %s22 = sshll.u32 [#allocation2], 4
      %s23 = int_to_ptr.vmem [resolvable:$true] %s22
      %28 = dma.hbm_to_vmem [thread:$0]  %s21, 64, %s23, [#allocation3], 64, 64, 4
    $region5: #{tpu_custom_call.1} parent=1 // pred_fallthru
      _
    // Predicated region
    $region6: #{tpu_custom_call.1} parent=1 // pred_check
      _
    $region7: #{tpu_custom_call.1} parent=1 // pred_check_branch
      %30 = sbr.rel (0) target = $region9
    $region8: #{tpu_custom_call.1} parent=1 // pred_region
      %32 = vsyncadd [#allocation6], 0
      %s33 = sshll.u32 %s1, 4
      %s34 = int_to_ptr.hbm [resolvable:$true] %s33
      %s35 = sshll.u32 [#allocation5], 4
      %s36 = int_to_ptr.vmem [resolvable:$true] %s35
      %41 = dma.hbm_to_vmem [thread:$0]  %s34, 4096, %s36, [#allocation6], 128, 128, 8
    $region9: #{tpu_custom_call.1} parent=1 // pred_fallthru
      _
    // Predicated region
    $region10: #{tpu_custom_call.1} parent=1 // pred_check
      _
    $region11: #{tpu_custom_call.1} parent=1 // pred_check_branch
      %43 = sbr.rel (0) target = $region13
    $region12: #{tpu_custom_call.1} parent=1 // pred_region
      _
    $region13: #{tpu_custom_call.1} parent=1 // pred_fallthru
      _
    // Predicated region
    $region14: #{tpu_custom_call.1} parent=1 // pred_check
      _
    $region15: #{tpu_custom_call.1} parent=1 // pred_check_branch
      %45 = sbr.rel (0) target = $region17
    $region16: #{tpu_custom_call.1} parent=1 // pred_region
      %47 = vsyncadd [#allocation6], 0
      %s48 = sshll.u32 %s3, 4
      %s49 = int_to_ptr.hbm [resolvable:$true] %s48
      %s50 = sshll.u32 [#allocation7], 4
      %s51 = int_to_ptr.vmem [resolvable:$true] %s50
      %56 = dma.hbm_to_vmem [thread:$0]  %s49, 2048, %s51, [#allocation6], 128, 128, 8
    $region17: #{tpu_custom_call.1} parent=1 // pred_fallthru
      _
    // Predicated region
    $region18: #{tpu_custom_call.1} parent=1 // pred_check
      _
    $region19: #{tpu_custom_call.1} parent=1 // pred_check_branch
      %58 = sbr.rel (0) target = $region21
    $region20: #{tpu_custom_call.1} parent=1 // pred_region
      _
    $region21: #{tpu_custom_call.1} parent=1 // pred_fallthru
      _
    // Predicated region
    $region22: #{tpu_custom_call.1} parent=1 // pred_check
      _
    $region23: #{tpu_custom_call.1} parent=1 // pred_check_branch
      %60 = sbr.rel (0) target = $region25
    $region24: #{tpu_custom_call.1} parent=1 // pred_region
      %62 = vsyncadd [#allocation9], 0
      %s63 = sshll.u32 %s5, 4
      %s64 = int_to_ptr.hbm [resolvable:$true] %s63
      %s65 = sshll.u32 [#allocation8], 4
      %s66 = int_to_ptr.vmem [resolvable:$true] %s65
      %71 = dma.hbm_to_vmem [thread:$0]  %s64, 2048, %s66, [#allocation9], 128, 128, 8
    $region25: #{tpu_custom_call.1} parent=1 // pred_fallthru
      _
    // Predicated region
    $region26: #{tpu_custom_call.1} parent=1 // pred_check
      _
    $region27: #{tpu_custom_call.1} parent=1 // pred_check_branch
      %73 = sbr.rel (0) target = $region29
    $region28: #{tpu_custom_call.1} parent=1 // pred_region
      _
    $region29: #{tpu_custom_call.1} parent=1 // pred_fallthru
      _
    // Predicated region
    $region30: #{tpu_custom_call.1} parent=1 // pred_check
      _
    $region31: #{tpu_custom_call.1} parent=1 // pred_check_branch
      %75 = sbr.rel (0) target = $region33
    $region32: #{tpu_custom_call.1} parent=1 // pred_region
      %77 = dma.done [#allocation3], 256
    $region33: #{tpu_custom_call.1} parent=1 // pred_fallthru
      _
    // Predicated region
    $region34: #{tpu_custom_call.1} parent=1 // pred_check
      _
    $region35: #{tpu_custom_call.1} parent=1 // pred_check_branch
      %79 = sbr.rel (0) target = $region37
    $region36: #{tpu_custom_call.1} parent=1 // pred_region
      %81 = dma.done [#allocation6], 4096
    $region37: #{tpu_custom_call.1} parent=1 // pred_fallthru
      _
    // Predicated region
    $region38: #{tpu_custom_call.1} parent=1 // pred_check
      _
    $region39: #{tpu_custom_call.1} parent=1 // pred_check_branch
      %83 = sbr.rel (0) target = $region41
    $region40: #{tpu_custom_call.1} parent=1 // pred_region
      %85 = dma.done [#allocation6], 2048
    $region41: #{tpu_custom_call.1} parent=1 // pred_fallthru
      _
    // Predicated region
    $region42: #{tpu_custom_call.1} parent=1 // pred_check
      _
    $region43: #{tpu_custom_call.1} parent=1 // pred_check_branch
      %87 = sbr.rel (0) target = $region45
    $region44: #{tpu_custom_call.1} parent=1 // pred_region
      %89 = dma.done [#allocation9], 2048
    $region45: #{tpu_custom_call.1} parent=1 // pred_fallthru
      _
    %v90 = vld [vmem:[#allocation2] sm:$0xf]
    %v91 = vld [vmem:[#allocation2 + $0x4] sm:$0xf]
    %v92 = vld [vmem:[#allocation2 + $0x8] sm:$0xf]
    %v93 = vld [vmem:[#allocation2 + $0xc] sm:$0xf]
    %v94 = vld [vmem:[#allocation5] sm:$0xff]
    %v95 = vld [vmem:[#allocation5 + $0x8] sm:$0xff]
    %v96 = vld [vmem:[#allocation5 + $0x10] sm:$0xff]
    %v97 = vld [vmem:[#allocation5 + $0x18] sm:$0xff]
    %v98 = vld [vmem:[#allocation5 + $0x20] sm:$0xff]
    %v99 = vld [vmem:[#allocation5 + $0x28] sm:$0xff]
    %v100 = vld [vmem:[#allocation5 + $0x30] sm:$0xff]
    %v101 = vld [vmem:[#allocation5 + $0x38] sm:$0xff]
    %v102 = vld [vmem:[#allocation5 + $0x40] sm:$0xff]
    %v103 = vld [vmem:[#allocation5 + $0x48] sm:$0xff]
    %v104 = vld [vmem:[#allocation5 + $0x50] sm:$0xff]
    %v105 = vld [vmem:[#allocation5 + $0x58] sm:$0xff]
    %v106 = vld [vmem:[#allocation5 + $0x60] sm:$0xff]
    %v107 = vld [vmem:[#allocation5 + $0x68] sm:$0xff]
    %v108 = vld [vmem:[#allocation5 + $0x70] sm:$0xff]
    %v109 = vld [vmem:[#allocation5 + $0x78] sm:$0xff]
    %v110 = vld [vmem:[#allocation5 + $0x80] sm:$0xff]
    %v111 = vld [vmem:[#allocation5 + $0x88] sm:$0xff]
    %v112 = vld [vmem:[#allocation5 + $0x90] sm:$0xff]
    %v113 = vld [vmem:[#allocation5 + $0x98] sm:$0xff]
    %v114 = vld [vmem:[#allocation5 + $0xa0] sm:$0xff]
    %v115 = vld [vmem:[#allocation5 + $0xa8] sm:$0xff]
    %v116 = vld [vmem:[#allocation5 + $0xb0] sm:$0xff]
    %v117 = vld [vmem:[#allocation5 + $0xb8] sm:$0xff]
    %v118 = vld [vmem:[#allocation5 + $0xc0] sm:$0xff]
    %v119 = vld [vmem:[#allocation5 + $0xc8] sm:$0xff]
    %v120 = vld [vmem:[#allocation5 + $0xd0] sm:$0xff]
    %v121 = vld [vmem:[#allocation5 + $0xd8] sm:$0xff]
    %v122 = vld [vmem:[#allocation5 + $0xe0] sm:$0xff]
    %v123 = vld [vmem:[#allocation5 + $0xe8] sm:$0xff]
    %v124 = vld [vmem:[#allocation5 + $0xf0] sm:$0xff]
    %v125 = vld [vmem:[#allocation5 + $0xf8] sm:$0xff]
    %v126 = vld [vmem:[%s2] sm:$0x1]
    %v128 = vperm.slane %v126, 0
    %134 = vst [vmem:[#allocation1] ss:$4 sm:$0xff] %v90
    %s135 = scalar_lea.vmem [#allocation1], 1
    %136 = vst [vmem:[%s135] ss:$4 sm:$0xff] %v91
    %s137 = scalar_lea.vmem [#allocation1], 2
    %138 = vst [vmem:[%s137] ss:$4 sm:$0xff] %v92
    %s139 = scalar_lea.vmem [#allocation1], 3
    %140 = vst [vmem:[%s139] ss:$4 sm:$0xff] %v93
    %v141 = vld.sshfl [vmem:[#allocation1] sm:$0xff pattern:$0x73625140]
    %v142 = vld.sshfl [vmem:[#allocation1 + $0x8] sm:$0xff pattern:$0x73625140]
    %145 = vmatpush.msra.mxu0 %v109
    %146 = vmatpush.msra.mxu0 %v108
    %147 = vmatpush.msra.mxu0 %v107
    %148 = vmatpush.msra.mxu0 %v106
    %149 = vmatpush.msra.mxu0 %v105
    %150 = vmatpush.msra.mxu0 %v104
    %151 = vmatpush.msra.mxu0 %v103
    %152 = vmatpush.msra.mxu0 %v102
    %153 = vmatpush.msra.mxu0 %v101
    %154 = vmatpush.msra.mxu0 %v100
    %155 = vmatpush.msra.mxu0 %v99
    %156 = vmatpush.msra.mxu0 %v98
    %157 = vmatpush.msra.mxu0 %v97
    %158 = vmatpush.msra.mxu0 %v96
    %159 = vmatpush.msra.mxu0 %v95
    %160 = vmatpush.msra.mxu0 %v94
    %161 = vmatmul.f32.gmra.mxu0 %v141
    %v162 = vpop.f32.mrf.mxu0
    %v163 = vadd.f32 %v128, %v162
    %164 = vdwg.mxu0
    %165 = vmatpush.msra.mxu0 %v125
    %166 = vmatpush.msra.mxu0 %v124
    %167 = vmatpush.msra.mxu0 %v123
    %168 = vmatpush.msra.mxu0 %v122
    %169 = vmatpush.msra.mxu0 %v121
    %170 = vmatpush.msra.mxu0 %v120
    %171 = vmatpush.msra.mxu0 %v119
    %172 = vmatpush.msra.mxu0 %v118
    %173 = vmatpush.msra.mxu0 %v117
    %174 = vmatpush.msra.mxu0 %v116
    %175 = vmatpush.msra.mxu0 %v115
    %176 = vmatpush.msra.mxu0 %v114
    %177 = vmatpush.msra.mxu0 %v113
    %178 = vmatpush.msra.mxu0 %v112
    %179 = vmatpush.msra.mxu0 %v111
    %180 = vmatpush.msra.mxu0 %v110
    %181 = vmatmul.f32.gmra.mxu0 %v142
    %v182 = vpop.f32.mrf.mxu0
    %v183 = vadd.f32 %v163, %v182
    %184 = vdwg.mxu0
    %v185 = vmax.f32 %v183, 0.0
    %v186 = vld [vmem:[#allocation7] sm:$0xff]
    %v187 = vld [vmem:[#allocation7 + $0x8] sm:$0xff]
    %v188 = vld [vmem:[#allocation7 + $0x10] sm:$0xff]
    %v189 = vld [vmem:[#allocation7 + $0x18] sm:$0xff]
    %v190 = vld [vmem:[#allocation7 + $0x20] sm:$0xff]
    %v191 = vld [vmem:[#allocation7 + $0x28] sm:$0xff]
    %v192 = vld [vmem:[#allocation7 + $0x30] sm:$0xff]
    %v193 = vld [vmem:[#allocation7 + $0x38] sm:$0xff]
    %v194 = vld [vmem:[#allocation7 + $0x40] sm:$0xff]
    %v195 = vld [vmem:[#allocation7 + $0x48] sm:$0xff]
    %v196 = vld [vmem:[#allocation7 + $0x50] sm:$0xff]
    %v197 = vld [vmem:[#allocation7 + $0x58] sm:$0xff]
    %v198 = vld [vmem:[#allocation7 + $0x60] sm:$0xff]
    %v199 = vld [vmem:[#allocation7 + $0x68] sm:$0xff]
    %v200 = vld [vmem:[#allocation7 + $0x70] sm:$0xff]
    %v201 = vld [vmem:[#allocation7 + $0x78] sm:$0xff]
    %v202 = vld [vmem:[%s4] sm:$0x1]
    %v204 = vperm.slane %v202, 0
    %206 = vmatpush.msra.mxu0 %v201
    %207 = vmatpush.msra.mxu0 %v200
    %208 = vmatpush.msra.mxu0 %v199
    %209 = vmatpush.msra.mxu0 %v198
    %210 = vmatpush.msra.mxu0 %v197
    %211 = vmatpush.msra.mxu0 %v196
    %212 = vmatpush.msra.mxu0 %v195
    %213 = vmatpush.msra.mxu0 %v194
    %214 = vmatpush.msra.mxu0 %v193
    %215 = vmatpush.msra.mxu0 %v192
    %216 = vmatpush.msra.mxu0 %v191
    %217 = vmatpush.msra.mxu0 %v190
    %218 = vmatpush.msra.mxu0 %v189
    %219 = vmatpush.msra.mxu0 %v188
    %220 = vmatpush.msra.mxu0 %v187
    %221 = vmatpush.msra.mxu0 %v186
    %222 = vmatmul.f32.gmra.mxu0 %v185
    %v223 = vpop.f32.mrf.mxu0
    %v224 = vadd.f32 %v204, %v223
    %225 = vdwg.mxu0
    %v226 = vmax.f32 %v224, 0.0
    %v227 = vld [vmem:[#allocation8] sm:$0xff]
    %v228 = vld [vmem:[#allocation8 + $0x8] sm:$0xff]
    %v229 = vld [vmem:[#allocation8 + $0x10] sm:$0xff]
    %v230 = vld [vmem:[#allocation8 + $0x18] sm:$0xff]
    %v231 = vld [vmem:[#allocation8 + $0x20] sm:$0xff]
    %v232 = vld [vmem:[#allocation8 + $0x28] sm:$0xff]
    %v233 = vld [vmem:[#allocation8 + $0x30] sm:$0xff]
    %v234 = vld [vmem:[#allocation8 + $0x38] sm:$0xff]
    %v235 = vld [vmem:[#allocation8 + $0x40] sm:$0xff]
    %v236 = vld [vmem:[#allocation8 + $0x48] sm:$0xff]
    %v237 = vld [vmem:[#allocation8 + $0x50] sm:$0xff]
    %v238 = vld [vmem:[#allocation8 + $0x58] sm:$0xff]
    %v239 = vld [vmem:[#allocation8 + $0x60] sm:$0xff]
    %v240 = vld [vmem:[#allocation8 + $0x68] sm:$0xff]
    %v241 = vld [vmem:[#allocation8 + $0x70] sm:$0xff]
    %v242 = vld [vmem:[#allocation8 + $0x78] sm:$0xff]
    %v243 = vld [vmem:[%s6] sm:$0x1]
    %v245 = vperm.slane %v243, 0
    %247 = vmatpush.msra.mxu0 %v242
    %248 = vmatpush.msra.mxu0 %v241
    %249 = vmatpush.msra.mxu0 %v240
    %250 = vmatpush.msra.mxu0 %v239
    %251 = vmatpush.msra.mxu0 %v238
    %252 = vmatpush.msra.mxu0 %v237
    %253 = vmatpush.msra.mxu0 %v236
    %254 = vmatpush.msra.mxu0 %v235
    %255 = vmatpush.msra.mxu0 %v234
    %256 = vmatpush.msra.mxu0 %v233
    %257 = vmatpush.msra.mxu0 %v232
    %258 = vmatpush.msra.mxu0 %v231
    %259 = vmatpush.msra.mxu0 %v230
    %260 = vmatpush.msra.mxu0 %v229
    %261 = vmatpush.msra.mxu0 %v228
    %262 = vmatpush.msra.mxu0 %v227
    %263 = vmatmul.f32.gmra.mxu0 %v226
    %v264 = vpop.f32.mrf.mxu0
    %v265 = vadd.f32 %v245, %v264
    %266 = vdwg.mxu0
    %267 = vst [vmem:[#allocation10] sm:$0xff] %v265
    // Predicated region
    $region46: #{tpu_custom_call.1} parent=1 // pred_check
      _
    $region47: #{tpu_custom_call.1} parent=1 // pred_check_branch
      %269 = sbr.rel (0) target = $region49
    $region48: #{tpu_custom_call.1} parent=1 // pred_region
      %271 = vsyncadd [#allocation4], 96
      %s272 = sshll.u32 [#allocation10], 4
      %s273 = int_to_ptr.vmem [resolvable:$true] %s272
      %s274 = sshll.u32 %s7, 4
      %s275 = int_to_ptr.hbm [resolvable:$true] %s274
      %280 = dma.vmem_to_hbm [thread:$0]  %s273, 32, %s275, [#allocation4], 32, 32, 2
    $region49: #{tpu_custom_call.1} parent=1 // pred_fallthru
      _
    // Predicated region
    $region50: #{tpu_custom_call.1} parent=1 // pred_check
      _
    $region51: #{tpu_custom_call.1} parent=1 // pred_check_branch
      %282 = sbr.rel (0) target = $region53
    $region52: #{tpu_custom_call.1} parent=1 // pred_region
      %284 = dma.done [#allocation4], 128
    $region53: #{tpu_custom_call.1} parent=1 // pred_fallthru
      _
    %285 = vsyncpa [#allocation3], 1
    %286 = vsyncpa [#allocation6], 1
    %287 = vsyncpa [#allocation9], 1
    %288 = vsyncpa [#allocation4], 1

</llo_original>
